<compile_context>
chip_gen: v6e
topology: v6e:2x2x1
jax: 0.10.0
libtpu: 0.0.40
codegen_flags: <defaults>
</compile_context>

<pallas_src>
import functools

import jax
import jax.numpy as jnp
from jax.experimental import pallas as pl
from jax.experimental.pallas import tpu as pltpu


def _triangle_kernel(x_ref, o_ref, *, power: float, inv_c: float):
    # x_ref block: (block_n, C, tile_hw), native dtype.
    x = x_ref[...]

    # Channel mean with f32 accumulation (cheap per-vreg upcast inside the
    # sublane reduction; avoids materialising a full f32 copy of bf16 blocks).
    # Subtract / relu / power stay in the native dtype (bf16 VALU on v6e/v7x).
    mean_c = (jnp.sum(x, axis=1, keepdims=True, dtype=jnp.float32) * inv_c)
    y = jnp.maximum(x - mean_c.astype(x.dtype), 0.0)

    p = float(power)
    if p != 1.0:
        if p == int(p) and 0 <= int(p) <= 8:
            # Small-integer fast path: VALU multiplies, no EUP pow.
            ip = int(p)
            if ip == 0:
                y = jnp.ones_like(y)
            else:
                acc = y
                for _ in range(ip - 1):
                    acc = acc * y
                y = acc
        else:
            # y >= 0 from the relu, so the exp/log lowering is safe.
            y = y ** p

    o_ref[...] = y.astype(o_ref.dtype)


def _round_up(v: int, m: int) -> int:
    return -(-v // m) * m


def _sublane(dtype) -> int:
    # 8 for f32, 16 for bf16, 32 for int8/fp8 (sub-32-bit packs along sublanes).
    return max(8, 32 // jnp.dtype(dtype).itemsize)


def _vmem_cap_bytes() -> int:
    """Scoped-VMEM cap with headroom below the physical VMEM (v7x: 64 MiB/TC)."""
    try:
        phys = int(pltpu.get_tpu_info().vmem_capacity_bytes)
        return max(32 << 20, (phys * 3) // 4)       # 48 MiB on v7x, 96 MiB on v5e/v6e
    except Exception:
        return 48 << 20                              # safe on v5e / v6e / v7x


def _block_bytes(block_n: int, c: int, tile_hw: int, dtype) -> int:
    """VMEM footprint of one block, including sublane/lane padding."""
    dsize = jnp.dtype(dtype).itemsize
    return block_n * _round_up(c, _sublane(dtype)) * _round_up(tile_hw, 128) * dsize


def _plan_blocks(n: int, c: int, hw: int, dtype, target_block_bytes: int):
    """Choose (block_n, tile_hw) so a block is ~target_block_bytes (lane-dense)."""
    dsize = jnp.dtype(dtype).itemsize
    sublane = _sublane(dtype)
    # HBM DMA traffic is always dense; sublane/lane padding only costs VMEM
    # budget, so account for it when sizing blocks.
    # TODO(synk): for C not a multiple of the sublane group (e.g. C=4 f32) a
    # dense (N*C, HW) repack with a grouped sublane mean would recover the
    # padded VMEM; real model channel counts (96/384/...) are sublane-aligned,
    # so the simple 3-D layout is kept.
    c_pad = _round_up(c, sublane)
    hw_pad = _round_up(hw, 128)
    bytes_per_n = c_pad * hw_pad * dsize

    if bytes_per_n <= target_block_bytes:
        # Whole (C, HW) slab fits: batch several N per block instead of tiling HW.
        block_n = int(max(1, min(n, target_block_bytes // bytes_per_n)))
        tile_hw = hw
    else:
        # Tile the flattened spatial dim, keeping it a multiple of 128 lanes.
        lanes = target_block_bytes // (c_pad * dsize)
        tile_hw = int(min(hw, max(128, (lanes // 128) * 128)))
        block_n = 1

    # v7x has two TensorCores: make sure there are >= 2 grid steps along a
    # "parallel" axis whenever the tensor can be split, so both cores stream.
    # (Zero cost on single-TC v5e/v6e.)
    if pl.cdiv(n, block_n) * pl.cdiv(hw, tile_hw) < 2:
        if n >= 2:
            block_n = pl.cdiv(n, 2)
        elif hw > 128 and tile_hw >= hw:
            tile_hw = _round_up(pl.cdiv(hw, 2), 128)

    return block_n, tile_hw


def triangle(
    x: jax.Array,
    power: float = 1.0,
    *,
    block_n: int | None = None,
    tile_hw: int | None = None,
    target_block_bytes: int = 8 * 1024 * 1024,
) -> jax.Array:
    """x: (N, C, H, W) -> (N, C, H, W), same dtype."""
    n, c, h, w = x.shape
    hw = h * w
    dtype = x.dtype

    vmem_cap = _vmem_cap_bytes()
    # Keep 2x(in + out) double-buffered blocks (4 * block_bytes) + headroom
    # inside the cap when auto-planning.
    auto_target = min(int(target_block_bytes), max(1 << 20, (vmem_cap - (4 << 20)) // 4))
    auto_bn, auto_thw = _plan_blocks(n, c, hw, dtype, auto_target)

    user_override = (block_n is not None) or (tile_hw is not None)
    if block_n is None:
        block_n = auto_bn
    if tile_hw is None:
        tile_hw = auto_thw
    block_n = int(min(max(1, block_n), n))
    tile_hw = int(min(max(1, tile_hw), hw))
    if tile_hw < hw:
        # BlockSpec constraint: last block dim must be a multiple of 128 lanes
        # (or span the full array dim).
        tile_hw = min(hw, _round_up(tile_hw, 128))

    blk_bytes = _block_bytes(block_n, c, tile_hw, dtype)
    vmem_needed = 4 * blk_bytes + (4 << 20)          # in + out double-buffered + scratch
    if vmem_needed > vmem_cap:
        if user_override:
            raise ValueError(
                f"triangle: requested blocks need ~{vmem_needed >> 20} MiB of scoped VMEM "
                f"(> {vmem_cap >> 20} MiB cap); pass smaller block_n / tile_hw.")
        # TODO(synk): tile the channel axis (two-pass mean, 'arbitrary' C grid
        # axis + f32 scratch accumulator) for very large channel counts.
        raise ValueError(
            f"triangle: a single (1, C={c}, 128) block does not fit in VMEM "
            f"({vmem_needed >> 20} MiB > {vmem_cap >> 20} MiB); channel tiling "
            "is not implemented.")
    vmem_limit = int(min(vmem_cap, max(32 << 20, vmem_needed)))

    x_flat = x.reshape(n, c, hw)
    grid = (pl.cdiv(n, block_n), pl.cdiv(hw, tile_hw))

    out_flat = pl.pallas_call(
        functools.partial(_triangle_kernel, power=float(power), inv_c=1.0 / c),
        out_shape=jax.ShapeDtypeStruct((n, c, hw), dtype),
        grid_spec=pltpu.PrefetchScalarGridSpec(
            num_scalar_prefetch=0,
            grid=grid,
            in_specs=[
                pl.BlockSpec((block_n, c, tile_hw), lambda i, j: (i, 0, j)),
            ],
            out_specs=pl.BlockSpec((block_n, c, tile_hw), lambda i, j: (i, 0, j)),
        ),
        compiler_params=pltpu.CompilerParams(
            # Both grid axes are independent -> shard across v7x's 2 TensorCores.
            dimension_semantics=("parallel", "parallel"),
            vmem_limit_bytes=vmem_limit,
        ),
    )(x_flat)

    return out_flat.reshape(n, c, h, w)


def triangle_ref(x: jax.Array, power: float = 1.0) -> jax.Array:
    """Pure-JAX reference mirroring the PyTorch module."""
    x = x - jnp.mean(x, axis=1, keepdims=True)
    return jnp.maximum(x, 0.0) ** power


if __name__ == "__main__":
    key = jax.random.PRNGKey(0)
    # Small NCHW input consistent with the module's expected conv-style input.
    x = jax.random.normal(key, (2, 4, 16, 16), dtype=jnp.float32)

    # Default power=1 (module default).
    out = jax.block_until_ready(triangle(x, power=1.0))
    ref = triangle_ref(x, power=1.0)
    assert out.shape == ref.shape and out.dtype == ref.dtype
    assert jnp.allclose(out, ref, atol=1e-5, rtol=1e-5), "mismatch vs reference (power=1)"

    # Integer-power fast path (VALU multiply instead of EUP pow).
    out2 = jax.block_until_ready(triangle(x, power=2.0))
    ref2 = triangle_ref(x, power=2.0)
    assert jnp.allclose(out2, ref2, atol=1e-5, rtol=1e-5), "mismatch vs reference (power=2)"

    # Exercise the cdiv / partial-tile path: odd N, HW not a multiple of 128,
    # forced small blocks (user-override path).
    x3 = jax.random.normal(jax.random.PRNGKey(1), (3, 4, 12, 25), dtype=jnp.float32)
    out3 = jax.block_until_ready(triangle(x3, power=1.0, block_n=2, tile_hw=128))
    ref3 = triangle_ref(x3, power=1.0)
    assert jnp.allclose(out3, ref3, atol=1e-5, rtol=1e-5), "mismatch vs reference (tail tiles)"

    # bf16 path: mean accumulated in f32, subtract/relu in native dtype.
    xb = jax.random.normal(jax.random.PRNGKey(2), (2, 8, 16, 16), dtype=jnp.bfloat16)
    outb = jax.block_until_ready(triangle(xb, power=1.0))
    refb = triangle_ref(xb.astype(jnp.float32), power=1.0)
    assert outb.dtype == jnp.bfloat16
    assert jnp.allclose(outb.astype(jnp.float32), refb, atol=5e-2, rtol=5e-2), \
        "mismatch vs reference (bf16)"

    print("KERNEL_OK")
</pallas_src>

<mosaic_0001>
module attributes {stable_mosaic.version = 11 : i64} {
  func.func @_triangle_kernel(%arg0: i32, %arg1: i32, %arg2: memref<1x4x256xf32, #tpu.memory_space<vmem>>, %arg3: memref<1x4x256xf32, #tpu.memory_space<vmem>>) attributes {dimension_semantics = [#tpu.dimension_semantics<parallel>, #tpu.dimension_semantics<parallel>], iteration_bounds = array<i64: 2, 1>, scalar_prefetch = 0 : i64, scratch_operands = 0 : i64, tpu.core_type = #tpu.core_type<tc>, window_params = [{transform_indices = @transform_0, window_bounds = array<i64: 1, 4, 256>}, {transform_indices = @transform_1, window_bounds = array<i64: 1, 4, 256>}]} {
    %c0 = arith.constant 0 : index
    %c0_0 = arith.constant 0 : index
    %c0_1 = arith.constant 0 : index
    %0 = vector.load %arg2[%c0, %c0_0, %c0_1] : memref<1x4x256xf32, #tpu.memory_space<vmem>>, vector<1x4x256xf32>
    %cst = arith.constant dense<0.000000e+00> : vector<1x256xf32>
    %1 = vector.multi_reduction <add>, %0, %cst [1] : vector<1x4x256xf32> to vector<1x256xf32>
    %2 = vector.shape_cast %1 : vector<1x256xf32> to vector<1x1x256xf32>
    %cst_2 = arith.constant 2.500000e-01 : f32
    %3 = vector.broadcast %cst_2 : f32 to vector<1x1x256xf32>
    %4 = arith.mulf %2, %3 : vector<1x1x256xf32>
    %5 = vector.broadcast %4 : vector<1x1x256xf32> to vector<1x4x256xf32>
    %6 = arith.subf %0, %5 : vector<1x4x256xf32>
    %cst_3 = arith.constant 0.000000e+00 : f32
    %7 = vector.broadcast %cst_3 : f32 to vector<1x4x256xf32>
    %8 = arith.maximumf %6, %7 : vector<1x4x256xf32>
    %c0_4 = arith.constant 0 : index
    %c0_5 = arith.constant 0 : index
    %c0_6 = arith.constant 0 : index
    %9 = vector.load %arg3[%c0_4, %c0_5, %c0_6] : memref<1x4x256xf32, #tpu.memory_space<vmem>>, vector<1x4x256xf32>
    tpu.vector_store %arg3[%c0_4, %c0_5, %c0_6], %8 {strides = array<i32>} : memref<1x4x256xf32, #tpu.memory_space<vmem>>, vector<1x4x256xf32>,
    return
  }
  func.func @transform_0(%arg0: i32, %arg1: i32) -> (i32, i32, i32) {
    %c0_i32 = arith.constant 0 : i32
    %c0_i32_0 = arith.constant 0 : i32
    return %arg0, %c0_i32, %arg1 : i32, i32, i32
  }
  func.func @transform_1(%arg0: i32, %arg1: i32) -> (i32, i32, i32) {
    %c0_i32 = arith.constant 0 : i32
    %c0_i32_0 = arith.constant 0 : i32
    return %arg0, %c0_i32, %arg1 : i32, i32, i32
  }
}

</mosaic_0001>

<llo_original>
// kernel: tpu_custom_call.1
$region0: #{tpu_custom_call.1}
  #allocation0 [shape = 'u32[]', space=smem, size = 0x4, offset = 0x4, fixed_abs, tag = 'smem constant byte address 0x4 - core index']
  #allocation1 [shape = 'u32[144,128]{1,0:T(1,128)}', space=vmem, size = 0x12000, scoped, tag = 'internal scratch']
  %s0 = inlined_call_operand.hbm [shape: f32[2,4,256], index: 0, kind: input, shape index: {}]
  %s1 = inlined_call_operand.hbm [shape: f32[2,4,256], index: 1, kind: output, shape index: {}]
  %s2 = sld [smem:[#allocation0]]
  $region41: #{tpu_custom_call.1} parent=0
    _
  %s4 = ssub.s32 1, %s2
  %s5 = scalar_select 0, %s4, %s2
  $region1: #{tpu_custom_call.1} parent=0
    #allocation2 [shape = 'u8[8192]{0}', space=vmem, size = 0x2000, scoped, tag = 'input window, operand 0']
    #allocation3 [shape = 's32[2]{0}', space=sflag, size = 0x8, scoped, tag = 'scoped memory for tpu_custom_call.1']
    #allocation4 [shape = 's32[2]{0}', space=sflag, size = 0x8, scoped, tag = 'scoped memory for tpu_custom_call.1']
    #allocation5 [shape = 'u8[8192]{0}', space=vmem, size = 0x2000, scoped, tag = 'output window, operand 0']
    %6 = vsyncpa [#allocation3], 0
    %s7 = scalar_lea.sflag [#allocation3], 1
    %8 = vsyncpa %s7, 0
    %9 = vsyncpa [#allocation4], 0
    %s10 = scalar_lea.sflag [#allocation4], 1
    %11 = vsyncpa %s10, 0
    loop: start=0, step=1, limit=4
    $region2: #{tpu_custom_call.1} parent=1 // loop_pre_header
      _
    $region3: #{tpu_custom_call.1} parent=1 // loop_header
      %s13 = sphi 0, %s17
      %p14 = scmp.ge.s32.totalorder %s13, 4
      %s20 = sphi 0, %s32
      %s21 = sphi 0, %s28
      %s22 = sphi 0, %s20
      %s23 = sphi 0, %s21
      %s24 = sphi 0, %s22
      %s25 = sphi 0, %s23
      %s37 = sphi 0, %s39
      %s40 = sphi 0, %s37
      %s41 = sphi 0, %s40
      %s57 = sphi 0, %s41
      %s65 = sphi 0, %s67
      %s68 = sphi 0, %s65
      %s69 = sphi 0, %s68
      %s85 = sphi 0, %s69
    $region4: #{tpu_custom_call.1} parent=1 // loop_header_branch
      %16 = sbr.rel (%p14) target = $region8
    $region5: #{tpu_custom_call.1} parent=1 // loop_body
      %s18 = ssub.s32 %s13, 1
      %s19 = ssub.s32 %s13, 2
      %s26 = sadd.s32 1, %s21
      %p27 = scmp.ge.s32.totalorder %s26, 1
      %s28 = scalar_select %p27, 0, %s26
      %s29 = sadd.s32 1, %s20
      %s30 = scalar_select %p27, %s29, %s20
      %p31 = scmp.ge.s32.totalorder %s30, 2
      %s32 = scalar_select %p31, 0, %s30
      %s33 = ssub.s32 %s20, %s32
      %s34 = ssub.s32 %s21, %s28
      %s35 = sor.u32 %s33, %s34
      %p36 = scmp.eq.s32.totalorder %s35, 0
      %s38 = sadd.s32 %s37, 1
      %s39 = scalar_select %p36, %s37, %s38
      %p42 = pneg %p36
      %p43 = scmp.eq.s32.totalorder %s13, 1
      %p44 = por %p42, %p43
      %p45 = scmp.ne.s32.totalorder %s37, %s40
      %p46 = scmp.eq.s32.totalorder %s13, 0
      %p47 = por %p45, %p46
      %p48 = scmp.ne.s32.totalorder %s37, %s40
      %p49 = scmp.eq.s32.totalorder %s18, 1
      %p50 = por %p48, %p49
      %p51 = scmp.ne.s32.totalorder %s40, %s41
      %p52 = scmp.eq.s32.totalorder %s18, 0
      %p53 = por %p51, %p52
      %p54 = scmp.ne.s32.totalorder %s40, %s41
      %p55 = scmp.eq.s32.totalorder %s19, 1
      %p56 = por %p54, %p55
      %p58 = scmp.ne.s32.totalorder %s41, %s57
      %p59 = scmp.eq.s32.totalorder %s19, 0
      %p60 = por %p58, %p59
      %s61 = ssub.s32 %s20, %s32
      %s62 = ssub.s32 %s21, %s28
      %s63 = sor.u32 %s61, %s62
      %p64 = scmp.eq.s32.totalorder %s63, 0
      %s66 = sadd.s32 %s65, 1
      %s67 = scalar_select %p64, %s65, %s66
      %p70 = pneg %p64
      %p71 = scmp.eq.s32.totalorder %s13, 1
      %p72 = por %p70, %p71
      %p73 = scmp.ne.s32.totalorder %s65, %s68
      %p74 = scmp.eq.s32.totalorder %s13, 0
      %p75 = por %p73, %p74
      %p76 = scmp.ne.s32.totalorder %s65, %s68
      %p77 = scmp.eq.s32.totalorder %s18, 1
      %p78 = por %p76, %p77
      %p79 = scmp.ne.s32.totalorder %s68, %s69
      %p80 = scmp.eq.s32.totalorder %s18, 0
      %p81 = por %p79, %p80
      %p82 = scmp.ne.s32.totalorder %s68, %s69
      %p83 = scmp.eq.s32.totalorder %s19, 1
      %p84 = por %p82, %p83
      %p86 = scmp.ne.s32.totalorder %s69, %s85
      %p87 = scmp.eq.s32.totalorder %s19, 0
      %p88 = por %p86, %p87
      %p89 = scmp.le.s32.totalorder 1, %s13
      %p90 = scmp.lt.s32.totalorder %s13, 3
      %p91 = pnand %p89, %p90
      %p92 = pneg %p91
      // Predicated region
      $region9: #{tpu_custom_call.1} parent=5 // pred_check
        _
      $region10: #{tpu_custom_call.1} parent=5 // pred_check_branch
        %94 = sbr.rel (%p91) target = $region12
      $region11: #{tpu_custom_call.1} parent=5 // pred_region
        %s95 = ssub.s32 %s13, 1
      $region12: #{tpu_custom_call.1} parent=5 // pred_fallthru
        _
      %p96 = scmp.lt.s32.totalorder %s13, 2
      // Predicated region
      $region13: #{tpu_custom_call.1} parent=5 // pred_check
        %p97 = pneg %p96
      $region14: #{tpu_custom_call.1} parent=5 // pred_check_branch
        %99 = sbr.rel (%p97) target = $region16
      $region15: #{tpu_custom_call.1} parent=5 // pred_region
        // Predicated region
        $region17: #{tpu_custom_call.1} parent=15 // pred_check
          %p100 = pneg %p47
        $region18: #{tpu_custom_call.1} parent=15 // pred_check_branch
          %102 = sbr.rel (%p100) target = $region20
        $region19: #{tpu_custom_call.1} parent=15 // pred_region
          %s103 = sand.u32 %s37, 1
          %s104 = scalar_lea.sflag [#allocation3], %s103
          %s105 = sand.u32 %s37, 1
          %s106 = smul.addr %s105, 8
          %s107 = scalar_lea.vmem [#allocation2], %s106
          %s108 = smul.u32 2, %s21
          %s110 = ssub.s32 128, 128
          %111 = vsyncadd %s104, %s110
          %s112 = smul.addr %s20, 2
          %s113 = sadd.s32 %s108, %s112
          %s114 = smul.addr %s113, 64
          %s115 = scalar_lea.hbm %s0, %s114
          %s117 = sshll.u32 %s107, 4
          %s118 = int_to_ptr.vmem [resolvable:$true] %s117
          %120 = dma.hbm_to_vmem [thread:$0]  %s115, 128, %s118, %s104
        $region20: #{tpu_custom_call.1} parent=15 // pred_fallthru
          _
      $region16: #{tpu_custom_call.1} parent=5 // pred_fallthru
        _
      %p121 = scmp.le.s32.totalorder 1, %s13
      %p122 = scmp.lt.s32.totalorder %s13, 3
      %p123 = pnand %p121, %p122
      %p124 = pneg %p123
      // Predicated region
      $region21: #{tpu_custom_call.1} parent=5 // pred_check
        _
      $region22: #{tpu_custom_call.1} parent=5 // pred_check_branch
        %126 = sbr.rel (%p123) target = $region24
      $region23: #{tpu_custom_call.1} parent=5 // pred_region
        %s127 = ssub.s32 %s13, 1
        %s128 = sand.u32 %s40, 1
        %s129 = scalar_lea.sflag [#allocation3], %s128
        %s130 = sand.u32 %s40, 1
        %s131 = smul.addr %s130, 8
        %s132 = scalar_lea.vmem [#allocation2], %s131
        // Predicated region
        $region25: #{tpu_custom_call.1} parent=23 // pred_check
          %p133 = pneg %p53
        $region26: #{tpu_custom_call.1} parent=23 // pred_check_branch
          %135 = sbr.rel (%p133) target = $region28
        $region27: #{tpu_custom_call.1} parent=23 // pred_region
          %136 = dma.done %s129, 128
        $region28: #{tpu_custom_call.1} parent=23 // pred_fallthru
          _
        %s137 = sand.u32 %s40, 1
        %s138 = scalar_lea.sflag [#allocation3], %s137
        %s139 = sand.u32 %s40, 1
        %s140 = smul.addr %s139, 8
        %s141 = scalar_lea.vmem [#allocation2], %s140
        %p142 = pneg %p53
        %p143 = pneg %p50
        %p144 = pneg %p81
        %p145 = pneg %p78
        %s146 = sand.u32 %s68, 1
        %s147 = scalar_lea.sflag [#allocation4], %s146
        %s148 = sand.u32 %s68, 1
        %s149 = smul.addr %s148, 8
        %s150 = scalar_lea.vmem [#allocation5], %s149
        %s151 = smul.u32 2, %s23
        %s152 = smul.u32 2, %s23
        %v153 = vld [vmem:[%s132] sm:$0xff]
        %v155 = vcombine.high %v153, %v153
        %vm157 = vcmask 1043456
        %v158 = vsel %vm157, %v153, 0.0
        %v159 = vrot.slane %v158, 4
        %v160 = vadd.f32 %v158, %v159
        %v161 = vrot.slane %v160, 2
        %v162 = vadd.f32 %v160, %v161
        %v163 = vrot.slane %v162, 1
        %v164 = vadd.f32 %v162, %v163
        %v165 = vsel %vm157, %v155, 0.0
        %v166 = vrot.slane %v165, 4
        %v167 = vadd.f32 %v165, %v166
        %v168 = vrot.slane %v167, 2
        %v169 = vadd.f32 %v167, %v168
        %v170 = vrot.slane %v169, 1
        %v171 = vadd.f32 %v169, %v170
        %v172 = vmul.f32 %v164, 0.25
        %v173 = vmul.f32 %v171, 0.25
        %v176 = vcombine.low %v172, %v173
        %v178 = vsub.f32 %v153, %v176
        %v179 = vmax.f32 %v178, 0.0
        %180 = vst [vmem:[%s150] sm:$0xff] %v179
        %s181 = sand.u32 %s68, 1
        %s182 = scalar_lea.sflag [#allocation4], %s181
        %s183 = sand.u32 %s68, 1
        %s184 = smul.addr %s183, 8
        %s185 = scalar_lea.vmem [#allocation5], %s184
        // Predicated region
        $region29: #{tpu_custom_call.1} parent=23 // pred_check
          %p186 = pneg %p78
        $region30: #{tpu_custom_call.1} parent=23 // pred_check_branch
          %188 = sbr.rel (%p186) target = $region32
        $region31: #{tpu_custom_call.1} parent=23 // pred_region
          %s189 = smul.u32 2, %s23
          %s191 = ssub.s32 128, 128
          %192 = vsyncadd %s182, %s191
          %s193 = smul.addr %s22, 2
          %s194 = sadd.s32 %s189, %s193
          %s195 = smul.addr %s194, 64
          %s196 = scalar_lea.hbm %s1, %s195
          %s198 = sshll.u32 %s185, 4
          %s199 = int_to_ptr.vmem [resolvable:$true] %s198
          %201 = dma.vmem_to_hbm [thread:$0]  %s199, 128, %s196, %s182
        $region32: #{tpu_custom_call.1} parent=23 // pred_fallthru
          _
      $region24: #{tpu_custom_call.1} parent=5 // pred_fallthru
        _
      %p202 = scmp.le.s32.totalorder 2, %s13
      // Predicated region
      $region33: #{tpu_custom_call.1} parent=5 // pred_check
        %p203 = pneg %p202
      $region34: #{tpu_custom_call.1} parent=5 // pred_check_branch
        %205 = sbr.rel (%p203) target = $region36
      $region35: #{tpu_custom_call.1} parent=5 // pred_region
        %s206 = ssub.s32 %s13, 2
        // Predicated region
        $region37: #{tpu_custom_call.1} parent=35 // pred_check
          %p207 = pneg %p84
        $region38: #{tpu_custom_call.1} parent=35 // pred_check_branch
          %209 = sbr.rel (%p207) target = $region40
        $region39: #{tpu_custom_call.1} parent=35 // pred_region
          %s210 = sand.u32 %s69, 1
          %s211 = scalar_lea.sflag [#allocation4], %s210
          %s212 = sand.u32 %s69, 1
          %s213 = smul.addr %s212, 8
          %s214 = scalar_lea.vmem [#allocation5], %s213
          %215 = dma.done %s211, 128
        $region40: #{tpu_custom_call.1} parent=35 // pred_fallthru
          _
      $region36: #{tpu_custom_call.1} parent=5 // pred_fallthru
        _
    $region6: #{tpu_custom_call.1} parent=1 // loop_footer
      %s17 = sadd.s32 1, %s13
    $region7: #{tpu_custom_call.1} parent=1 // loop_footer_branch
      %12 = sbr.rel target = $region3
    $region8: #{tpu_custom_call.1} parent=1 // loop_exit
      _
    %216 = vsyncpa [#allocation3], 1
    %s217 = scalar_lea.sflag [#allocation3], 1
    %218 = vsyncpa %s217, 1
    %219 = vsyncpa [#allocation4], 1
    %s220 = scalar_lea.sflag [#allocation4], 1
    %221 = vsyncpa %s220, 1

</llo_original>
